<compile_context>
chip_gen: v6e
topology: v6e:2x2x1
jax: 0.10.0
libtpu: 0.0.40
codegen_flags: <defaults>
</compile_context>

<pallas_src>
import inspect

import jax
import jax.numpy as jnp
from jax.experimental import pallas as pl
from jax.experimental.pallas import tpu as pltpu

BN_EPS = 1e-5

# pl.Buffered(1) on constant operands drops their second VMEM buffer; guard on
# the installed JAX actually exposing the pipeline_mode knob.
try:
    _HAS_BUFFERED = hasattr(pl, "Buffered") and (
        "pipeline_mode" in inspect.signature(pl.BlockSpec).parameters
    )
except (TypeError, ValueError):
    _HAS_BUFFERED = False


def se_kernel(x_ref, w1_ref, b1_ref, w2_ref, b2_ref, out_ref):
    # x_ref/out_ref: (TN, C, HW) tile -- channels on sublanes, spatial on lanes.
    x = x_ref[...]                                           # input dtype

    # AdaptiveAvgPool2d(1): f32-accumulated sum over the spatial (lane) axis.
    # (The 1/HW factor is pre-folded into w1 on the host.)
    pooled = jnp.sum(x, axis=-1, dtype=jnp.float32)          # (TN, C)

    # Conv2d(C -> B, 1x1) == matmul + bias, then ReLU.
    y = jnp.dot(pooled, w1_ref[...],
                preferred_element_type=jnp.float32) + b1_ref[...]   # (TN, B)
    y = jnp.maximum(y, 0.0)

    # BatchNorm2d(B) (eval mode) is pre-folded into w2/b2.
    # Conv2d(B -> C, 1x1) + Sigmoid.
    s = jnp.dot(y, w2_ref[...],
                preferred_element_type=jnp.float32) + b2_ref[...]   # (TN, C)
    s = jax.nn.sigmoid(s)

    # Channel-wise rescale in the input dtype (no full-tile f32 copy);
    # broadcast s along the spatial (lane) axis.
    out_ref[...] = (x * s.astype(x.dtype)[:, :, None]).astype(out_ref.dtype)


def _pick_tn(n, per_elem_bytes, target_bytes=4 << 20,
             min_tile_bytes=1 << 20, min_steps=8):
    """Batch elements per grid step.

    Start from the largest TN whose input tile is <= target_bytes, then shrink
    it until there are >= min_steps grid steps (pipelined read/write overlap +
    megacore sharding on v7x) as long as the tile stays >= min_tile_bytes.
    """
    tn = int(max(1, min(n, target_bytes // max(per_elem_bytes, 1))))
    while (tn > 1 and n // tn < min_steps
           and (tn - 1) * per_elem_bytes >= min_tile_bytes):
        tn -= 1
    while n % tn != 0:          # keep the batch grid exact (no ragged tile)
        tn -= 1
    return max(tn, 1)


def _vmem_limit(in_tile_bytes, out_tile_bytes, weight_bytes):
    """Scoped-VMEM budget from the actual footprint (double-buffered x/out,
    weights + headroom), capped at 48 MiB so it stays safe on v7x (64 MiB)."""
    need = 2 * (in_tile_bytes + out_tile_bytes) + 2 * weight_bytes + (4 << 20)
    return int(min(max(need, 16 << 20), 48 << 20))


def se_module(x, params):
    """x: (N, C, H, W), any float dtype.  Returns (N, C, H, W) in x.dtype."""
    N, C, H, W = x.shape
    HW = H * W

    w1, b1, gamma, beta, mean, var, w2, b2 = params
    B = w1.shape[1]

    # Free reshape only -- no NCHW<->NHWC transpose, so x crosses HBM exactly
    # once on the way in and once on the way out.
    x_flat = x.reshape(N, C, HW)

    # Host-side weight prep (done once, tiny):
    #   * fold the 1/HW of the average pool into w1 (kernel uses a sum),
    #   * fold eval-mode BatchNorm into the second 1x1 conv.
    w1p = (w1 / HW).astype(jnp.float32)                            # (C, B)
    scale = gamma * jax.lax.rsqrt(var + BN_EPS)                    # (1, B)
    shift = beta - mean * scale                                    # (1, B)
    w2f = (w2 * scale.reshape(-1, 1)).astype(jnp.float32)          # (B, C)
    b2f = (b2 + shift @ w2).astype(jnp.float32)                    # (1, C)
    # TODO(synk): training-mode BatchNorm (batch statistics + running-stat
    # update) is not implemented; eval-mode running stats only.

    per_elem_bytes = C * HW * x.dtype.itemsize
    TN = _pick_tn(N, per_elem_bytes)
    grid = (N // TN,)
    # TODO(synk): if a single (C, HW) slab ever exceeds the VMEM budget even at
    # TN=1, a spatially-chunked two-pass variant (pool pass + rescale pass)
    # would be needed; not required for Res2Net SE-block shapes.

    tile_bytes = TN * per_elem_bytes
    weight_bytes = 4 * (w1p.size + b1.size + w2f.size + b2f.size)
    vmem_limit = _vmem_limit(tile_bytes, tile_bytes, weight_bytes)

    const_kwargs = {"pipeline_mode": pl.Buffered(1)} if _HAS_BUFFERED else {}

    def const_spec(shape):
        return pl.BlockSpec(shape, lambda n: (0,) * len(shape), **const_kwargs)

    out_flat = pl.pallas_call(
        se_kernel,
        out_shape=jax.ShapeDtypeStruct((N, C, HW), x.dtype),
        grid_spec=pltpu.PrefetchScalarGridSpec(
            num_scalar_prefetch=0,
            grid=grid,
            in_specs=[
                pl.BlockSpec((TN, C, HW), lambda n: (n, 0, 0)),    # x
                const_spec((C, B)),                                # w1 (pool-folded)
                const_spec((1, B)),                                # b1
                const_spec((B, C)),                                # w2 (BN-folded)
                const_spec((1, C)),                                # b2 (BN-folded)
            ],
            out_specs=pl.BlockSpec((TN, C, HW), lambda n: (n, 0, 0)),
        ),
        compiler_params=pltpu.CompilerParams(
            dimension_semantics=("parallel",),
            vmem_limit_bytes=vmem_limit,
        ),
    )(x_flat, w1p, b1, w2f, b2f)

    return out_flat.reshape(N, C, H, W)


def se_module_ref(x, params):
    """Pure-JAX reference matching the PyTorch forward (BN in eval mode)."""
    w1, b1, gamma, beta, mean, var, w2, b2 = params
    xf = x.astype(jnp.float32)
    pooled = jnp.mean(xf, axis=(2, 3))                     # (N, C)
    y = jnp.maximum(pooled @ w1 + b1, 0.0)                 # (N, B)
    y = (y - mean) * jax.lax.rsqrt(var + BN_EPS) * gamma + beta
    s = jax.nn.sigmoid(y @ w2 + b2)                        # (N, C)
    return xf * s[:, :, None, None]


def init_params(key, channels, bottleneck):
    k = jax.random.split(key, 8)
    # Conv2d(C, B, 1): weight (B, C, 1, 1) -> stored transposed as (C, B)
    w1 = jax.random.normal(k[0], (channels, bottleneck), jnp.float32) * 0.1
    b1 = jax.random.normal(k[1], (1, bottleneck), jnp.float32) * 0.1
    # BatchNorm2d(B) buffers (non-trivial values to exercise the fold)
    gamma = 1.0 + 0.1 * jax.random.normal(k[2], (1, bottleneck), jnp.float32)
    beta = 0.1 * jax.random.normal(k[3], (1, bottleneck), jnp.float32)
    mean = 0.05 * jax.random.normal(k[4], (1, bottleneck), jnp.float32)
    var = 1.0 + 0.1 * jax.random.uniform(k[5], (1, bottleneck), jnp.float32)
    # Conv2d(B, C, 1): weight (C, B, 1, 1) -> stored transposed as (B, C)
    w2 = jax.random.normal(k[6], (bottleneck, channels), jnp.float32) * 0.1
    b2 = jax.random.normal(k[7], (1, channels), jnp.float32) * 0.1
    return (w1, b1, gamma, beta, mean, var, w2, b2)


if __name__ == "__main__":
    N, C, H, W = 2, 4, 16, 16
    bottleneck = 8

    key = jax.random.PRNGKey(0)
    kx, kp = jax.random.split(key)
    x = jax.random.normal(kx, (N, C, H, W), jnp.float32)
    params = init_params(kp, C, bottleneck)

    # float32 path
    out = jax.block_until_ready(se_module(x, params))
    ref = se_module_ref(x, params)
    assert out.shape == (N, C, H, W) and out.dtype == x.dtype
    assert jnp.allclose(out, ref, atol=2e-5, rtol=2e-5), "f32 mismatch vs reference"

    # bf16 path (activation dtype preserved end-to-end; pool/matmuls in f32)
    xb = x.astype(jnp.bfloat16)
    out_b = jax.block_until_ready(se_module(xb, params))
    ref_b = se_module_ref(xb.astype(jnp.float32), params)
    assert out_b.dtype == jnp.bfloat16
    assert jnp.allclose(out_b.astype(jnp.float32), ref_b, atol=2e-2, rtol=3e-2), \
        "bf16 mismatch vs reference"

    print("KERNEL_OK")
</pallas_src>

<mosaic_0001>
module attributes {stable_mosaic.version = 11 : i64} {
  func.func @se_kernel(%arg0: i32, %arg1: memref<2x4x256xf32, #tpu.memory_space<vmem>>, %arg2: memref<4x8xf32, #tpu.memory_space<vmem>>, %arg3: memref<1x8xf32, #tpu.memory_space<vmem>>, %arg4: memref<8x4xf32, #tpu.memory_space<vmem>>, %arg5: memref<1x4xf32, #tpu.memory_space<vmem>>, %arg6: memref<2x4x256xf32, #tpu.memory_space<vmem>>) attributes {dimension_semantics = [#tpu.dimension_semantics<parallel>], iteration_bounds = array<i64: 1>, scalar_prefetch = 0 : i64, scratch_operands = 0 : i64, tpu.core_type = #tpu.core_type<tc>, window_params = [{transform_indices = @transform_0, window_bounds = array<i64: 2, 4, 256>}, {pipeline_mode = #tpu.pipeline_mode<synchronous>, transform_indices = @transform_1, window_bounds = array<i64: 4, 8>}, {pipeline_mode = #tpu.pipeline_mode<synchronous>, transform_indices = @transform_2, window_bounds = array<i64: 1, 8>}, {pipeline_mode = #tpu.pipeline_mode<synchronous>, transform_indices = @transform_3, window_bounds = array<i64: 8, 4>}, {pipeline_mode = #tpu.pipeline_mode<synchronous>, transform_indices = @transform_4, window_bounds = array<i64: 1, 4>}, {transform_indices = @transform_5, window_bounds = array<i64: 2, 4, 256>}]} {
    %c0 = arith.constant 0 : index
    %c0_0 = arith.constant 0 : index
    %c0_1 = arith.constant 0 : index
    %0 = vector.load %arg1[%c0, %c0_0, %c0_1] : memref<2x4x256xf32, #tpu.memory_space<vmem>>, vector<2x4x256xf32>
    %cst = arith.constant dense<0.000000e+00> : vector<2x4xf32>
    %1 = vector.multi_reduction <add>, %0, %cst [2] : vector<2x4x256xf32> to vector<2x4xf32>
    %c0_2 = arith.constant 0 : index
    %c0_3 = arith.constant 0 : index
    %2 = vector.load %arg2[%c0_2, %c0_3] : memref<4x8xf32, #tpu.memory_space<vmem>>, vector<4x8xf32>
    %cst_4 = arith.constant dense<0.000000e+00> : vector<2x8xf32>
    %3 = tpu.matmul %1, %2, %cst_4 {dimension_numbers = #tpu.dot_dimension_numbers<[1], [0], [0], [1], [0, 0, 1, 1], [], []>} : vector<2x4xf32>, vector<4x8xf32>, vector<2x8xf32> -> vector<2x8xf32>
    %c0_5 = arith.constant 0 : index
    %c0_6 = arith.constant 0 : index
    %4 = vector.load %arg3[%c0_5, %c0_6] : memref<1x8xf32, #tpu.memory_space<vmem>>, vector<1x8xf32>
    %5 = vector.broadcast %4 : vector<1x8xf32> to vector<2x8xf32>
    %6 = arith.addf %3, %5 : vector<2x8xf32>
    %cst_7 = arith.constant 0.000000e+00 : f32
    %7 = vector.broadcast %cst_7 : f32 to vector<2x8xf32>
    %8 = arith.maximumf %6, %7 : vector<2x8xf32>
    %c0_8 = arith.constant 0 : index
    %c0_9 = arith.constant 0 : index
    %9 = vector.load %arg4[%c0_8, %c0_9] : memref<8x4xf32, #tpu.memory_space<vmem>>, vector<8x4xf32>
    %cst_10 = arith.constant dense<0.000000e+00> : vector<2x4xf32>
    %10 = tpu.matmul %8, %9, %cst_10 {dimension_numbers = #tpu.dot_dimension_numbers<[1], [0], [0], [1], [0, 0, 1, 1], [], []>} : vector<2x8xf32>, vector<8x4xf32>, vector<2x4xf32> -> vector<2x4xf32>
    %c0_11 = arith.constant 0 : index
    %c0_12 = arith.constant 0 : index
    %11 = vector.load %arg5[%c0_11, %c0_12] : memref<1x4xf32, #tpu.memory_space<vmem>>, vector<1x4xf32>
    %12 = vector.broadcast %11 : vector<1x4xf32> to vector<2x4xf32>
    %13 = arith.addf %10, %12 : vector<2x4xf32>
    %14 = arith.negf %13 : vector<2x4xf32>
    %15 = math.exp %14 : vector<2x4xf32>
    %cst_13 = arith.constant 1.000000e+00 : f32
    %16 = vector.broadcast %cst_13 : f32 to vector<2x4xf32>
    %17 = arith.addf %16, %15 : vector<2x4xf32>
    %18 = arith.divf %16, %17 : vector<2x4xf32>
    %19 = vector.shape_cast %18 : vector<2x4xf32> to vector<2x4x1xf32>
    %20 = vector.broadcast %19 : vector<2x4x1xf32> to vector<2x4x256xf32>
    %21 = arith.mulf %0, %20 : vector<2x4x256xf32>
    %c0_14 = arith.constant 0 : index
    %c0_15 = arith.constant 0 : index
    %c0_16 = arith.constant 0 : index
    %22 = vector.load %arg6[%c0_14, %c0_15, %c0_16] : memref<2x4x256xf32, #tpu.memory_space<vmem>>, vector<2x4x256xf32>
    tpu.vector_store %arg6[%c0_14, %c0_15, %c0_16], %21 {strides = array<i32>} : memref<2x4x256xf32, #tpu.memory_space<vmem>>, vector<2x4x256xf32>,
    return
  }
  func.func @transform_0(%arg0: i32) -> (i32, i32, i32) {
    %c0_i32 = arith.constant 0 : i32
    %c0_i32_0 = arith.constant 0 : i32
    %c0_i32_1 = arith.constant 0 : i32
    return %arg0, %c0_i32, %c0_i32_0 : i32, i32, i32
  }
  func.func @transform_1(%arg0: i32) -> (i32, i32) {
    %c0_i32 = arith.constant 0 : i32
    %c0_i32_0 = arith.constant 0 : i32
    %c0_i32_1 = arith.constant 0 : i32
    return %c0_i32, %c0_i32_0 : i32, i32
  }
  func.func @transform_2(%arg0: i32) -> (i32, i32) {
    %c0_i32 = arith.constant 0 : i32
    %c0_i32_0 = arith.constant 0 : i32
    %c0_i32_1 = arith.constant 0 : i32
    return %c0_i32, %c0_i32_0 : i32, i32
  }
  func.func @transform_3(%arg0: i32) -> (i32, i32) {
    %c0_i32 = arith.constant 0 : i32
    %c0_i32_0 = arith.constant 0 : i32
    %c0_i32_1 = arith.constant 0 : i32
    return %c0_i32, %c0_i32_0 : i32, i32
  }
  func.func @transform_4(%arg0: i32) -> (i32, i32) {
    %c0_i32 = arith.constant 0 : i32
    %c0_i32_0 = arith.constant 0 : i32
    %c0_i32_1 = arith.constant 0 : i32
    return %c0_i32, %c0_i32_0 : i32, i32
  }
  func.func @transform_5(%arg0: i32) -> (i32, i32, i32) {
    %c0_i32 = arith.constant 0 : i32
    %c0_i32_0 = arith.constant 0 : i32
    %c0_i32_1 = arith.constant 0 : i32
    return %arg0, %c0_i32, %c0_i32_0 : i32, i32, i32
  }
}

</mosaic_0001>

<llo_original>
// kernel: tpu_custom_call.1
$region0: #{tpu_custom_call.1}
  #allocation0 [shape = 'u32[]', space=smem, size = 0x4, offset = 0x4, fixed_abs, tag = 'smem constant byte address 0x4 - core index']
  #allocation1 [shape = 'u32[144,128]{1,0:T(1,128)}', space=vmem, size = 0x12000, scoped, tag = 'internal scratch']
  %s0 = inlined_call_operand.hbm [shape: f32[2,4,256], index: 0, kind: input, shape index: {}]
  %s1 = inlined_call_operand.vmem [shape: f32[4,8], index: 1, kind: input, shape index: {}]
  %s2 = inlined_call_operand.vmem [shape: f32[1,8], index: 2, kind: input, shape index: {}]
  %s3 = inlined_call_operand.vmem [shape: f32[8,4], index: 3, kind: input, shape index: {}]
  %s4 = inlined_call_operand.vmem [shape: f32[1,4], index: 4, kind: input, shape index: {}]
  %s5 = inlined_call_operand.hbm [shape: f32[2,4,256], index: 5, kind: output, shape index: {}]
  %s6 = sld [smem:[#allocation0]]
  $region34: #{tpu_custom_call.1} parent=0
    _
  %s8 = ssub.s32 1, %s6
  %s9 = scalar_select 0, %s8, %s6
  $region1: #{tpu_custom_call.1} parent=0
    #allocation2 [shape = 'u8[8192]{0}', space=vmem, size = 0x2000, scoped, tag = 'input window, operand 0, single buffered']
    #allocation3 [shape = 's32[1]{0}', space=sflag, size = 0x4, scoped, tag = 'scoped memory for tpu_custom_call.1']
    #allocation4 [shape = 's32[1]{0}', space=sflag, size = 0x4, scoped, tag = 'scoped memory for tpu_custom_call.1']
    #allocation5 [shape = 'u8[8192]{0}', space=vmem, size = 0x2000, scoped, tag = 'output window, operand 0, single buffered']
    %10 = vsyncpa [#allocation3], 0
    %11 = vsyncpa [#allocation4], 0
    // Predicated region
    $region2: #{tpu_custom_call.1} parent=1 // pred_check
      _
    $region3: #{tpu_custom_call.1} parent=1 // pred_check_branch
      %13 = sbr.rel (0) target = $region5
    $region4: #{tpu_custom_call.1} parent=1 // pred_region
      %s15 = ssub.s32 256, 256
      %16 = vsyncadd [#allocation3], %s15
      %s17 = sshll.u32 [#allocation2], 4
      %s18 = int_to_ptr.vmem [resolvable:$true] %s17
      %23 = dma.hbm_to_vmem [thread:$0]  %s0, 256, %s18, [#allocation3], 128, 128, 8
    $region5: #{tpu_custom_call.1} parent=1 // pred_fallthru
      _
    // Predicated region
    $region6: #{tpu_custom_call.1} parent=1 // pred_check
      _
    $region7: #{tpu_custom_call.1} parent=1 // pred_check_branch
      %25 = sbr.rel (0) target = $region9
    $region8: #{tpu_custom_call.1} parent=1 // pred_region
      _
    $region9: #{tpu_custom_call.1} parent=1 // pred_fallthru
      _
    // Predicated region
    $region10: #{tpu_custom_call.1} parent=1 // pred_check
      _
    $region11: #{tpu_custom_call.1} parent=1 // pred_check_branch
      %27 = sbr.rel (0) target = $region13
    $region12: #{tpu_custom_call.1} parent=1 // pred_region
      _
    $region13: #{tpu_custom_call.1} parent=1 // pred_fallthru
      _
    // Predicated region
    $region14: #{tpu_custom_call.1} parent=1 // pred_check
      _
    $region15: #{tpu_custom_call.1} parent=1 // pred_check_branch
      %29 = sbr.rel (0) target = $region17
    $region16: #{tpu_custom_call.1} parent=1 // pred_region
      _
    $region17: #{tpu_custom_call.1} parent=1 // pred_fallthru
      _
    // Predicated region
    $region18: #{tpu_custom_call.1} parent=1 // pred_check
      _
    $region19: #{tpu_custom_call.1} parent=1 // pred_check_branch
      %31 = sbr.rel (0) target = $region21
    $region20: #{tpu_custom_call.1} parent=1 // pred_region
      _
    $region21: #{tpu_custom_call.1} parent=1 // pred_fallthru
      _
    // Predicated region
    $region22: #{tpu_custom_call.1} parent=1 // pred_check
      _
    $region23: #{tpu_custom_call.1} parent=1 // pred_check_branch
      %33 = sbr.rel (0) target = $region25
    $region24: #{tpu_custom_call.1} parent=1 // pred_region
      %34 = dma.done [#allocation3], 256
    $region25: #{tpu_custom_call.1} parent=1 // pred_fallthru
      _
    %v35 = vld [vmem:[#allocation2] sm:$0xff]
    %v36 = vld [vmem:[#allocation2 + $0x8] sm:$0xff]
    %v39 = vcombine.high %v35, %v35
    %v40 = vcombine.high %v36, %v36
    %vm43 = vcmask 1043456
    %v44 = vsel %vm43, %v35, 0.0
    %v45 = vsel %vm43, %v39, 0.0
    %v46 = vadd.f32 %v44, %v45
    %47 = vadd.xlane.f32.xlu0 %v46
    %v48 = vpop.xlane.xlu0 %47
    %v49 = vsel %vm43, %v36, 0.0
    %v50 = vsel %vm43, %v40, 0.0
    %v51 = vadd.f32 %v49, %v50
    %52 = vadd.xlane.f32.xlu0 %v51
    %v53 = vpop.xlane.xlu0 %52
    %v54 = vld [vmem:[%s1] sm:$0xf]
    %v55 = vld [vmem:[%s2] sm:$0x1]
    %v57 = vlaneseq
    %v58 = vshrl.u32 %v57, 7
    %v59 = vsub.s32 0, %v58
    %v60 = vrot.slane %v55, %v59
    %v64 = vlaneseq
    %v65 = vand.u32 %v64, 127
    %v66 = vlaneseq
    %v67 = vshrl.u32 %v66, 7
    %v68 = vsub.s32 %v65, %v67
    %v69 = vrot.slane %v48, %v68
    %v70 = vlaneseq
    %v71 = vshrl.u32 %v70, 7
    %v72 = vsub.s32 %v65, %v71
    %v73 = vrot.slane %v53, %v72
    %vm74 = vcmask 1041409
    %v75 = vsel %vm74, %v73, %v69
    %vm76 = vcmask 31744
    %v77 = vsel %vm76, %v75, 0
    %v80 = vsel %vm43, %v54, 0
    %82 = vmatprep.subr.mxu0 0.0
    %83 = vmatpush1.msra.mxu0 0.0
    %84 = vmatprep.subr.mxu0 0.0
    %85 = vmatpush1.msra.mxu0 0.0
    %86 = vmatprep.subr.mxu0 0.0
    %87 = vmatpush1.msra.mxu0 0.0
    %88 = vmatprep.subr.mxu0 0.0
    %89 = vmatpush1.msra.mxu0 0.0
    %90 = vmatprep.subr.mxu0 0.0
    %91 = vmatpush1.msra.mxu0 0.0
    %92 = vmatprep.subr.mxu0 0.0
    %93 = vmatpush1.msra.mxu0 0.0
    %94 = vmatprep.subr.mxu0 0.0
    %95 = vmatpush1.msra.mxu0 0.0
    %96 = vmatprep.subr.mxu0 0.0
    %97 = vmatpush1.msra.mxu0 0.0
    %98 = vmatprep.subr.mxu0 0.0
    %99 = vmatpush1.msra.mxu0 0.0
    %100 = vmatprep.subr.mxu0 0.0
    %101 = vmatpush1.msra.mxu0 0.0
    %102 = vmatprep.subr.mxu0 0.0
    %103 = vmatpush1.msra.mxu0 0.0
    %104 = vmatprep.subr.mxu0 0.0
    %105 = vmatpush1.msra.mxu0 0.0
    %106 = vmatprep.subr.mxu0 0.0
    %107 = vmatpush1.msra.mxu0 0.0
    %108 = vmatprep.subr.mxu0 0.0
    %109 = vmatpush1.msra.mxu0 0.0
    %110 = vmatprep.subr.mxu0 0.0
    %111 = vmatpush1.msra.mxu0 0.0
    %112 = vmatprep.subr.mxu0 0.0
    %113 = vmatpush1.msra.mxu0 %v80
    %114 = vmatprep.subr.mxu0 0.0
    %115 = vmatpush2.msra.mxu0 0.0
    %116 = vmatprep.subr.mxu0 0.0
    %117 = vmatpush2.msra.mxu0 0.0
    %118 = vmatprep.subr.mxu0 0.0
    %119 = vmatpush2.msra.mxu0 0.0
    %120 = vmatprep.subr.mxu0 0.0
    %121 = vmatpush2.msra.mxu0 0.0
    %122 = vmatprep.subr.mxu0 0.0
    %123 = vmatpush2.msra.mxu0 0.0
    %124 = vmatprep.subr.mxu0 0.0
    %125 = vmatpush2.msra.mxu0 0.0
    %126 = vmatprep.subr.mxu0 0.0
    %127 = vmatpush2.msra.mxu0 0.0
    %128 = vmatprep.subr.mxu0 0.0
    %129 = vmatpush2.msra.mxu0 0.0
    %130 = vmatprep.subr.mxu0 0.0
    %131 = vmatpush2.msra.mxu0 0.0
    %132 = vmatprep.subr.mxu0 0.0
    %133 = vmatpush2.msra.mxu0 0.0
    %134 = vmatprep.subr.mxu0 0.0
    %135 = vmatpush2.msra.mxu0 0.0
    %136 = vmatprep.subr.mxu0 0.0
    %137 = vmatpush2.msra.mxu0 0.0
    %138 = vmatprep.subr.mxu0 0.0
    %139 = vmatpush2.msra.mxu0 0.0
    %140 = vmatprep.subr.mxu0 0.0
    %141 = vmatpush2.msra.mxu0 0.0
    %142 = vmatprep.subr.mxu0 0.0
    %143 = vmatpush2.msra.mxu0 0.0
    %144 = vmatprep.subr.mxu0 0.0
    %145 = vmatpush2.msra.mxu0 0.0
    %146 = vmatprep.mubr.f32.mxu0 0.0
    %147 = vmatmul.mubr.f32.gmra.mxu0 %v77
    %v148 = vpop.f32.mrf.mxu0
    %v149 = vadd.f32 %v60, %v148
    %v150 = vpop.f32.mrf.mxu0
    %151 = vdwg.mxu0
    %v152 = vmax.f32 %v149, 0.0
    %v153 = vld [vmem:[%s3] sm:$0xff]
    %v154 = vld [vmem:[%s4] sm:$0x1]
    %v156 = vlaneseq
    %v157 = vshrl.u32 %v156, 7
    %v158 = vsub.s32 0, %v157
    %v159 = vrot.slane %v154, %v158
    %vm161 = vcmask 64512
    %v163 = vsel %vm161, %v152, 0
    %165 = vmatprep.subr.mxu0 0.0
    %166 = vmatpush1.msra.mxu0 0.0
    %167 = vmatprep.subr.mxu0 0.0
    %168 = vmatpush1.msra.mxu0 0.0
    %169 = vmatprep.subr.mxu0 0.0
    %170 = vmatpush1.msra.mxu0 0.0
    %171 = vmatprep.subr.mxu0 0.0
    %172 = vmatpush1.msra.mxu0 0.0
    %173 = vmatprep.subr.mxu0 0.0
    %174 = vmatpush1.msra.mxu0 0.0
    %175 = vmatprep.subr.mxu0 0.0
    %176 = vmatpush1.msra.mxu0 0.0
    %177 = vmatprep.subr.mxu0 0.0
    %178 = vmatpush1.msra.mxu0 0.0
    %179 = vmatprep.subr.mxu0 0.0
    %180 = vmatpush1.msra.mxu0 0.0
    %181 = vmatprep.subr.mxu0 0.0
    %182 = vmatpush1.msra.mxu0 0.0
    %183 = vmatprep.subr.mxu0 0.0
    %184 = vmatpush1.msra.mxu0 0.0
    %185 = vmatprep.subr.mxu0 0.0
    %186 = vmatpush1.msra.mxu0 0.0
    %187 = vmatprep.subr.mxu0 0.0
    %188 = vmatpush1.msra.mxu0 0.0
    %189 = vmatprep.subr.mxu0 0.0
    %190 = vmatpush1.msra.mxu0 0.0
    %191 = vmatprep.subr.mxu0 0.0
    %192 = vmatpush1.msra.mxu0 0.0
    %193 = vmatprep.subr.mxu0 0.0
    %194 = vmatpush1.msra.mxu0 0.0
    %195 = vmatprep.subr.mxu0 0.0
    %196 = vmatpush1.msra.mxu0 %v153
    %197 = vmatprep.subr.mxu0 0.0
    %198 = vmatpush2.msra.mxu0 0.0
    %199 = vmatprep.subr.mxu0 0.0
    %200 = vmatpush2.msra.mxu0 0.0
    %201 = vmatprep.subr.mxu0 0.0
    %202 = vmatpush2.msra.mxu0 0.0
    %203 = vmatprep.subr.mxu0 0.0
    %204 = vmatpush2.msra.mxu0 0.0
    %205 = vmatprep.subr.mxu0 0.0
    %206 = vmatpush2.msra.mxu0 0.0
    %207 = vmatprep.subr.mxu0 0.0
    %208 = vmatpush2.msra.mxu0 0.0
    %209 = vmatprep.subr.mxu0 0.0
    %210 = vmatpush2.msra.mxu0 0.0
    %211 = vmatprep.subr.mxu0 0.0
    %212 = vmatpush2.msra.mxu0 0.0
    %213 = vmatprep.subr.mxu0 0.0
    %214 = vmatpush2.msra.mxu0 0.0
    %215 = vmatprep.subr.mxu0 0.0
    %216 = vmatpush2.msra.mxu0 0.0
    %217 = vmatprep.subr.mxu0 0.0
    %218 = vmatpush2.msra.mxu0 0.0
    %219 = vmatprep.subr.mxu0 0.0
    %220 = vmatpush2.msra.mxu0 0.0
    %221 = vmatprep.subr.mxu0 0.0
    %222 = vmatpush2.msra.mxu0 0.0
    %223 = vmatprep.subr.mxu0 0.0
    %224 = vmatpush2.msra.mxu0 0.0
    %225 = vmatprep.subr.mxu0 0.0
    %226 = vmatpush2.msra.mxu0 0.0
    %227 = vmatprep.subr.mxu0 0.0
    %228 = vmatpush2.msra.mxu0 0.0
    %229 = vmatprep.mubr.f32.mxu0 0.0
    %230 = vmatmul.mubr.f32.gmra.mxu0 %v163
    %v231 = vpop.f32.mrf.mxu0
    %v232 = vadd.f32 %v159, %v231
    %v233 = vpop.f32.mrf.mxu0
    %234 = vdwg.mxu0
    %v235 = vxor.u32 %v232, 2147483648
    %v236 = vmul.f32 %v235, 1.442695
    %v237 = vpow.pop %v236
    %v238 = vadd.f32 %v237, 1.0
    %v239 = vrcp.pop %v238
    %v240 = vmul.f32 1.0, %v239
    %v241 = vlaneseq
    %v242 = vshrl.u32 %v241, 7
    %v243 = vsub.s32 0, %v242
    %v244 = vrot.slane %v240, %v243
    %246 = vbcast.lane.b32.xlu0 %v244, 256
    %v247 = vpop.permute.xlu0 %246
    %v248 = vlaneseq
    %v249 = vshrl.u32 %v248, 7
    %v250 = vsub.s32 1, %v249
    %v251 = vrot.slane %v240, %v250
    %253 = vbcast.lane.b32.xlu0 %v251, 256
    %v254 = vpop.permute.xlu0 %253
    %v258 = vunpack.c.l.s4 839922192
    %v259 = vunpack.c.0.s8 %v258
    %v260 = vlaneseq
    %v261 = vshrl.u32 %v260, 7
    %v262 = vsub.s32 %v259, %v261
    %v263 = vrot.slane %v247, %v262
    %v265 = vunpack.c.l.s4 839922192
    %v266 = vunpack.c.0.s8 %v265
    %v267 = vlaneseq
    %v268 = vshrl.u32 %v267, 7
    %v269 = vsub.s32 %v266, %v268
    %v270 = vrot.slane %v254, %v269
    %v273 = vmul.f32 %v35, %v263
    %v274 = vmul.f32 %v36, %v270
    %275 = vst [vmem:[#allocation5] sm:$0xff] %v273
    %276 = vst [vmem:[#allocation5 + $0x8] sm:$0xff] %v274
    // Predicated region
    $region26: #{tpu_custom_call.1} parent=1 // pred_check
      _
    $region27: #{tpu_custom_call.1} parent=1 // pred_check_branch
      %278 = sbr.rel (0) target = $region29
    $region28: #{tpu_custom_call.1} parent=1 // pred_region
      %s280 = ssub.s32 256, 256
      %281 = vsyncadd [#allocation4], %s280
      %s282 = sshll.u32 [#allocation5], 4
      %s283 = int_to_ptr.vmem [resolvable:$true] %s282
      %288 = dma.vmem_to_hbm [thread:$0]  %s283, 256, %s5, [#allocation4], 128, 128, 8
    $region29: #{tpu_custom_call.1} parent=1 // pred_fallthru
      _
    // Predicated region
    $region30: #{tpu_custom_call.1} parent=1 // pred_check
      _
    $region31: #{tpu_custom_call.1} parent=1 // pred_check_branch
      %290 = sbr.rel (0) target = $region33
    $region32: #{tpu_custom_call.1} parent=1 // pred_region
      %291 = dma.done [#allocation4], 256
    $region33: #{tpu_custom_call.1} parent=1 // pred_fallthru
      _
    %292 = vsyncpa [#allocation3], 1
    %293 = vsyncpa [#allocation4], 1

</llo_original>
